<compile_context>
chip_gen: v7x
topology: tpu7x:2x2x1
jax: 0.10.0
libtpu: 0.0.40
codegen_flags: <defaults>
</compile_context>

<pallas_src>
import jax
import jax.numpy as jnp
from jax.experimental import pallas as pl
from jax.experimental.pallas import tpu as pltpu

# BipedalWalker-v3 dimensions (env not available; hard-coded deterministically)
STATE_DIM = 24
ACTION_DIM = 4
MAX_ACTION = 1.0
H1 = 400
H2 = 300


def actor_kernel(x_ref, w1_ref, b1_ref, w2_ref, b2_ref, w3_ref, b3_ref, o_ref):
    # Feature dims (24/400/300/4) are tiny -> no K/N tiling; only the batch
    # axis is tiled by the grid. Weights are bf16, accumulation is f32.
    x = x_ref[...]                                                   # bf16 [TB, 24]
    h = jnp.dot(x, w1_ref[...], preferred_element_type=jnp.float32) + b1_ref[...]
    h = jnp.maximum(h, 0.0).astype(jnp.bfloat16)                     # ReLU
    h = jnp.dot(h, w2_ref[...], preferred_element_type=jnp.float32) + b2_ref[...]
    h = jnp.maximum(h, 0.0).astype(jnp.bfloat16)                     # ReLU
    a = jnp.dot(h, w3_ref[...], preferred_element_type=jnp.float32) + b3_ref[...]
    a = jnp.tanh(a)                                                  # EUP
    if MAX_ACTION != 1.0:                                            # folded at trace time
        a = a * MAX_ACTION
    o_ref[...] = a.astype(o_ref.dtype)


def _round_up(x, m):
    return (x + m - 1) // m * m


def actor_forward(state, params, *, tb=256):
    """state: [B, STATE_DIM] float32 -> actions [B, ACTION_DIM] float32.

    params: (w1, b1, w2, b2, w3, b3) with bf16 weights [in, out] and f32
    biases [1, out]. The batch axis is tiled with tile size `tb` (multiple of
    16); weights stay VMEM-resident across grid steps.
    """
    w1, b1, w2, b2, w3, b3 = params
    B = state.shape[0]

    tb = min(tb, _round_up(B, 16))           # don't over-tile tiny batches
    Bp = _round_up(B, tb)                    # pad batch to a whole number of tiles

    x = state.astype(jnp.bfloat16)
    if Bp != B:
        x = jnp.pad(x, ((0, Bp - B), (0, 0)))

    grid = (Bp // tb,)

    resident = lambda arr: pl.BlockSpec(arr.shape, lambda i: (0, 0))  # same block every step

    out = pl.pallas_call(
        actor_kernel,
        out_shape=jax.ShapeDtypeStruct((Bp, ACTION_DIM), jnp.float32),
        grid=grid,
        in_specs=[
            pl.BlockSpec((tb, STATE_DIM), lambda i: (i, 0)),   # streamed / pipelined
            resident(w1), resident(b1),
            resident(w2), resident(b2),
            resident(w3), resident(b3),
        ],
        out_specs=pl.BlockSpec((tb, ACTION_DIM), lambda i: (i, 0)),
        compiler_params=pltpu.CompilerParams(
            dimension_semantics=("parallel",),                 # uses both TCs on v7x
        ),
    )(x, w1, b1, w2, b2, w3, b3)

    return out[:B]


def init_params(key):
    """Deterministic init mirroring nn.Linear default (uniform(-1/sqrt(fan_in), ...)).

    Weights are stored bf16 (kernel compute dtype); biases stay f32 (added to
    the f32 accumulator inside the kernel).
    """
    ks = jax.random.split(key, 6)

    def linear(kw, kb, fan_in, fan_out):
        bound = 1.0 / jnp.sqrt(fan_in)
        w = jax.random.uniform(kw, (fan_in, fan_out), jnp.float32, -bound, bound)
        b = jax.random.uniform(kb, (1, fan_out), jnp.float32, -bound, bound)
        return w.astype(jnp.bfloat16), b

    w1, b1 = linear(ks[0], ks[1], STATE_DIM, H1)
    w2, b2 = linear(ks[2], ks[3], H1, H2)
    w3, b3 = linear(ks[4], ks[5], H2, ACTION_DIM)
    return (w1, b1, w2, b2, w3, b3)


def actor_ref(state, params):
    """Pure-JAX f32 reference (same bf16 weight values, f32 math)."""
    w1, b1, w2, b2, w3, b3 = params
    w1, w2, w3 = (w.astype(jnp.float32) for w in (w1, w2, w3))
    h = jax.nn.relu(state @ w1 + b1)
    h = jax.nn.relu(h @ w2 + b2)
    return jnp.tanh(h @ w3 + b3) * MAX_ACTION


if __name__ == "__main__":
    key = jax.random.PRNGKey(0)
    k_params, k_state = jax.random.split(key)
    params = init_params(k_params)

    batch = 64
    state = jax.random.normal(k_state, (batch, STATE_DIM), jnp.float32)

    out = actor_forward(state, params)
    out = jax.block_until_ready(out)

    ref = actor_ref(state, params)
    assert out.shape == (batch, ACTION_DIM)
    # bf16 activations/MXU vs f32 reference -> loosened tolerance.
    assert jnp.allclose(out, ref, atol=2e-2, rtol=2e-2), float(jnp.max(jnp.abs(out - ref)))
    print("KERNEL_OK")
</pallas_src>

<mosaic_0001>
module attributes {stable_mosaic.version = 11 : i64} {
  func.func @actor_kernel(%arg0: i32, %arg1: memref<64x24xbf16, #tpu.memory_space<vmem>>, %arg2: memref<24x400xbf16, #tpu.memory_space<vmem>>, %arg3: memref<1x400xf32, #tpu.memory_space<vmem>>, %arg4: memref<400x300xbf16, #tpu.memory_space<vmem>>, %arg5: memref<1x300xf32, #tpu.memory_space<vmem>>, %arg6: memref<300x4xbf16, #tpu.memory_space<vmem>>, %arg7: memref<1x4xf32, #tpu.memory_space<vmem>>, %arg8: memref<64x4xf32, #tpu.memory_space<vmem>>) attributes {dimension_semantics = [#tpu.dimension_semantics<parallel>], iteration_bounds = array<i64: 1>, scalar_prefetch = 0 : i64, scratch_operands = 0 : i64, tpu.core_type = #tpu.core_type<tc>, window_params = [{transform_indices = @transform_0, window_bounds = array<i64: 64, 24>}, {pipeline_mode = #tpu.pipeline_mode<synchronous>, transform_indices = @transform_1, window_bounds = array<i64: 24, 400>}, {pipeline_mode = #tpu.pipeline_mode<synchronous>, transform_indices = @transform_2, window_bounds = array<i64: 1, 400>}, {pipeline_mode = #tpu.pipeline_mode<synchronous>, transform_indices = @transform_3, window_bounds = array<i64: 400, 300>}, {pipeline_mode = #tpu.pipeline_mode<synchronous>, transform_indices = @transform_4, window_bounds = array<i64: 1, 300>}, {pipeline_mode = #tpu.pipeline_mode<synchronous>, transform_indices = @transform_5, window_bounds = array<i64: 300, 4>}, {pipeline_mode = #tpu.pipeline_mode<synchronous>, transform_indices = @transform_6, window_bounds = array<i64: 1, 4>}, {transform_indices = @transform_7, window_bounds = array<i64: 64, 4>}]} {
    %c0 = arith.constant 0 : index
    %c0_0 = arith.constant 0 : index
    %0 = vector.load %arg1[%c0, %c0_0] : memref<64x24xbf16, #tpu.memory_space<vmem>>, vector<64x24xbf16>
    %c0_1 = arith.constant 0 : index
    %c0_2 = arith.constant 0 : index
    %1 = vector.load %arg2[%c0_1, %c0_2] : memref<24x400xbf16, #tpu.memory_space<vmem>>, vector<24x400xbf16>
    %cst = arith.constant dense<0.000000e+00> : vector<64x400xf32>
    %2 = tpu.matmul %0, %1, %cst {dimension_numbers = #tpu.dot_dimension_numbers<[1], [0], [0], [1], [0, 0, 1, 1], [], []>} : vector<64x24xbf16>, vector<24x400xbf16>, vector<64x400xf32> -> vector<64x400xf32>
    %c0_3 = arith.constant 0 : index
    %c0_4 = arith.constant 0 : index
    %3 = vector.load %arg3[%c0_3, %c0_4] : memref<1x400xf32, #tpu.memory_space<vmem>>, vector<1x400xf32>
    %4 = vector.broadcast %3 : vector<1x400xf32> to vector<64x400xf32>
    %5 = arith.addf %2, %4 : vector<64x400xf32>
    %cst_5 = arith.constant 0.000000e+00 : f32
    %6 = vector.broadcast %cst_5 : f32 to vector<64x400xf32>
    %7 = arith.maximumf %5, %6 : vector<64x400xf32>
    %8 = arith.truncf %7 : vector<64x400xf32> to vector<64x400xbf16>
    %c0_6 = arith.constant 0 : index
    %c0_7 = arith.constant 0 : index
    %9 = vector.load %arg4[%c0_6, %c0_7] : memref<400x300xbf16, #tpu.memory_space<vmem>>, vector<400x300xbf16>
    %cst_8 = arith.constant dense<0.000000e+00> : vector<64x300xf32>
    %10 = tpu.matmul %8, %9, %cst_8 {dimension_numbers = #tpu.dot_dimension_numbers<[1], [0], [0], [1], [0, 0, 1, 1], [], []>} : vector<64x400xbf16>, vector<400x300xbf16>, vector<64x300xf32> -> vector<64x300xf32>
    %c0_9 = arith.constant 0 : index
    %c0_10 = arith.constant 0 : index
    %11 = vector.load %arg5[%c0_9, %c0_10] : memref<1x300xf32, #tpu.memory_space<vmem>>, vector<1x300xf32>
    %12 = vector.broadcast %11 : vector<1x300xf32> to vector<64x300xf32>
    %13 = arith.addf %10, %12 : vector<64x300xf32>
    %cst_11 = arith.constant 0.000000e+00 : f32
    %14 = vector.broadcast %cst_11 : f32 to vector<64x300xf32>
    %15 = arith.maximumf %13, %14 : vector<64x300xf32>
    %16 = arith.truncf %15 : vector<64x300xf32> to vector<64x300xbf16>
    %c0_12 = arith.constant 0 : index
    %c0_13 = arith.constant 0 : index
    %17 = vector.load %arg6[%c0_12, %c0_13] : memref<300x4xbf16, #tpu.memory_space<vmem>>, vector<300x4xbf16>
    %cst_14 = arith.constant dense<0.000000e+00> : vector<64x4xf32>
    %18 = tpu.matmul %16, %17, %cst_14 {dimension_numbers = #tpu.dot_dimension_numbers<[1], [0], [0], [1], [0, 0, 1, 1], [], []>} : vector<64x300xbf16>, vector<300x4xbf16>, vector<64x4xf32> -> vector<64x4xf32>
    %c0_15 = arith.constant 0 : index
    %c0_16 = arith.constant 0 : index
    %19 = vector.load %arg7[%c0_15, %c0_16] : memref<1x4xf32, #tpu.memory_space<vmem>>, vector<1x4xf32>
    %20 = vector.broadcast %19 : vector<1x4xf32> to vector<64x4xf32>
    %21 = arith.addf %18, %20 : vector<64x4xf32>
    %22 = math.tanh %21 : vector<64x4xf32>
    %c0_17 = arith.constant 0 : index
    %c0_18 = arith.constant 0 : index
    %23 = vector.load %arg8[%c0_17, %c0_18] : memref<64x4xf32, #tpu.memory_space<vmem>>, vector<64x4xf32>
    tpu.vector_store %arg8[%c0_17, %c0_18], %22 {strides = array<i32>} : memref<64x4xf32, #tpu.memory_space<vmem>>, vector<64x4xf32>,
    return
  }
  func.func @transform_0(%arg0: i32) -> (i32, i32) {
    %c0_i32 = arith.constant 0 : i32
    %c0_i32_0 = arith.constant 0 : i32
    return %arg0, %c0_i32 : i32, i32
  }
  func.func @transform_1(%arg0: i32) -> (i32, i32) {
    %c0_i32 = arith.constant 0 : i32
    %c0_i32_0 = arith.constant 0 : i32
    %c0_i32_1 = arith.constant 0 : i32
    return %c0_i32, %c0_i32_0 : i32, i32
  }
  func.func @transform_2(%arg0: i32) -> (i32, i32) {
    %c0_i32 = arith.constant 0 : i32
    %c0_i32_0 = arith.constant 0 : i32
    %c0_i32_1 = arith.constant 0 : i32
    return %c0_i32, %c0_i32_0 : i32, i32
  }
  func.func @transform_3(%arg0: i32) -> (i32, i32) {
    %c0_i32 = arith.constant 0 : i32
    %c0_i32_0 = arith.constant 0 : i32
    %c0_i32_1 = arith.constant 0 : i32
    return %c0_i32, %c0_i32_0 : i32, i32
  }
  func.func @transform_4(%arg0: i32) -> (i32, i32) {
    %c0_i32 = arith.constant 0 : i32
    %c0_i32_0 = arith.constant 0 : i32
    %c0_i32_1 = arith.constant 0 : i32
    return %c0_i32, %c0_i32_0 : i32, i32
  }
  func.func @transform_5(%arg0: i32) -> (i32, i32) {
    %c0_i32 = arith.constant 0 : i32
    %c0_i32_0 = arith.constant 0 : i32
    %c0_i32_1 = arith.constant 0 : i32
    return %c0_i32, %c0_i32_0 : i32, i32
  }
  func.func @transform_6(%arg0: i32) -> (i32, i32) {
    %c0_i32 = arith.constant 0 : i32
    %c0_i32_0 = arith.constant 0 : i32
    %c0_i32_1 = arith.constant 0 : i32
    return %c0_i32, %c0_i32_0 : i32, i32
  }
  func.func @transform_7(%arg0: i32) -> (i32, i32) {
    %c0_i32 = arith.constant 0 : i32
    %c0_i32_0 = arith.constant 0 : i32
    return %arg0, %c0_i32 : i32, i32
  }
}

</mosaic_0001>

<llo_original>
// kernel: tpu_custom_call.1
$region0: #{tpu_custom_call.1}
  #allocation0 [shape = 'u32[]', space=smem, size = 0x4, offset = 0x4, fixed_abs, tag = 'smem constant byte address 0x4 - core index']
  #allocation1 [shape = 'u32[144,128]{1,0:T(1,128)}', space=vmem, size = 0x12000, scoped, tag = 'internal scratch']
  %s0 = inlined_call_operand.vmem [shape: bf16[64,24], index: 0, kind: input, shape index: {}]
  %s1 = inlined_call_operand.vmem [shape: bf16[24,400], index: 1, kind: input, shape index: {}]
  %s2 = inlined_call_operand.vmem [shape: f32[1,400], index: 2, kind: input, shape index: {}]
  %s3 = inlined_call_operand.hbm [shape: bf16[400,300], index: 3, kind: input, shape index: {}]
  %s4 = inlined_call_operand.vmem [shape: f32[1,300], index: 4, kind: input, shape index: {}]
  %s5 = inlined_call_operand.vmem [shape: bf16[300,4], index: 5, kind: input, shape index: {}]
  %s6 = inlined_call_operand.vmem [shape: f32[1,4], index: 6, kind: input, shape index: {}]
  %s7 = inlined_call_operand.vmem [shape: f32[64,4], index: 7, kind: output, shape index: {}]
  %s8 = sld [smem:[#allocation0]]
  $region42: #{tpu_custom_call.1} parent=0
    _
  %s10 = ssub.s32 1, %s8
  %s11 = scalar_select 0, %s10, %s8
  $region1: #{tpu_custom_call.1} parent=0
    #allocation2 [shape = 'u8[307200]{0}', space=vmem, size = 0x4b000, scoped, tag = 'input window, operand 3, single buffered']
    #allocation3 [shape = 's32[1]{0}', space=sflag, size = 0x4, scoped, tag = 'scoped memory for tpu_custom_call.1']
    %12 = vsyncpa [#allocation3], 0
    // Predicated region
    $region2: #{tpu_custom_call.1} parent=1 // pred_check
      _
    $region3: #{tpu_custom_call.1} parent=1 // pred_check_branch
      %14 = sbr.rel (0) target = $region5
    $region4: #{tpu_custom_call.1} parent=1 // pred_region
      _
    $region5: #{tpu_custom_call.1} parent=1 // pred_fallthru
      _
    // Predicated region
    $region6: #{tpu_custom_call.1} parent=1 // pred_check
      _
    $region7: #{tpu_custom_call.1} parent=1 // pred_check_branch
      %16 = sbr.rel (0) target = $region9
    $region8: #{tpu_custom_call.1} parent=1 // pred_region
      _
    $region9: #{tpu_custom_call.1} parent=1 // pred_fallthru
      _
    // Predicated region
    $region10: #{tpu_custom_call.1} parent=1 // pred_check
      _
    $region11: #{tpu_custom_call.1} parent=1 // pred_check_branch
      %18 = sbr.rel (0) target = $region13
    $region12: #{tpu_custom_call.1} parent=1 // pred_region
      _
    $region13: #{tpu_custom_call.1} parent=1 // pred_fallthru
      _
    // Predicated region
    $region14: #{tpu_custom_call.1} parent=1 // pred_check
      _
    $region15: #{tpu_custom_call.1} parent=1 // pred_check_branch
      %20 = sbr.rel (0) target = $region17
    $region16: #{tpu_custom_call.1} parent=1 // pred_region
      %s22 = ssub.s32 9600, 9600
      %23 = vsyncadd [#allocation3], %s22
      %s24 = sshll.u32 [#allocation2], 4
      %s25 = int_to_ptr.vmem [resolvable:$true] %s24
      %30 = dma.hbm_to_vmem [thread:$0]  %s3, 9600, %s25, [#allocation3], 192, 192, 12
    $region17: #{tpu_custom_call.1} parent=1 // pred_fallthru
      _
    // Predicated region
    $region18: #{tpu_custom_call.1} parent=1 // pred_check
      _
    $region19: #{tpu_custom_call.1} parent=1 // pred_check_branch
      %32 = sbr.rel (0) target = $region21
    $region20: #{tpu_custom_call.1} parent=1 // pred_region
      _
    $region21: #{tpu_custom_call.1} parent=1 // pred_fallthru
      _
    // Predicated region
    $region22: #{tpu_custom_call.1} parent=1 // pred_check
      _
    $region23: #{tpu_custom_call.1} parent=1 // pred_check_branch
      %34 = sbr.rel (0) target = $region25
    $region24: #{tpu_custom_call.1} parent=1 // pred_region
      _
    $region25: #{tpu_custom_call.1} parent=1 // pred_fallthru
      _
    // Predicated region
    $region26: #{tpu_custom_call.1} parent=1 // pred_check
      _
    $region27: #{tpu_custom_call.1} parent=1 // pred_check_branch
      %36 = sbr.rel (0) target = $region29
    $region28: #{tpu_custom_call.1} parent=1 // pred_region
      _
    $region29: #{tpu_custom_call.1} parent=1 // pred_fallthru
      _
    // Predicated region
    $region30: #{tpu_custom_call.1} parent=1 // pred_check
      _
    $region31: #{tpu_custom_call.1} parent=1 // pred_check_branch
      %38 = sbr.rel (0) target = $region33
    $region32: #{tpu_custom_call.1} parent=1 // pred_region
      %39 = dma.done [#allocation3], 9600
    $region33: #{tpu_custom_call.1} parent=1 // pred_fallthru
      _
    %v41 = vld [vmem:[%s0] sm:$0xf]
    %v42 = vld [vmem:[%s0 + $0x4] sm:$0xf]
    %v43 = vld [vmem:[%s0 + $0x8] sm:$0xf]
    %v44 = vld [vmem:[%s0 + $0xc] sm:$0xf]
    %v45 = vld [vmem:[%s0 + $0x10] sm:$0xf]
    %v46 = vld [vmem:[%s0 + $0x14] sm:$0xf]
    %v47 = vld [vmem:[%s0 + $0x18] sm:$0xf]
    %v48 = vld [vmem:[%s0 + $0x1c] sm:$0xf]
    %v49 = vld [vmem:[%s1] sm:$0xff]
    %v50 = vld [vmem:[%s1 + $0x8] sm:$0xff]
    %v51 = vld [vmem:[%s1 + $0x10] sm:$0xff]
    %v52 = vld [vmem:[%s1 + $0x18] sm:$0xff]
    %v53 = vld [vmem:[%s1 + $0x20] sm:$0xff]
    %v54 = vld [vmem:[%s1 + $0x28] sm:$0xff]
    %v55 = vld [vmem:[%s2] sm:$0xf]
    %v57 = vlaneseq
    %v58 = vshrl.u32 %v57, 7
    %v59 = vsub.s32 0, %v58
    %v60 = vrot.slane %v55, %v59
    %v61 = vlaneseq
    %v62 = vshrl.u32 %v61, 7
    %v63 = vsub.s32 1, %v62
    %v64 = vrot.slane %v55, %v63
    %v65 = vlaneseq
    %v66 = vshrl.u32 %v65, 7
    %v67 = vsub.s32 2, %v66
    %v68 = vrot.slane %v55, %v67
    %v69 = vlaneseq
    %v70 = vshrl.u32 %v69, 7
    %v71 = vsub.s32 3, %v70
    %v72 = vrot.slane %v55, %v71
    %v85 = vunpack.c.l.b16 %v41
    %v86 = vunpack.c.l.b16 %v42
    %v87 = vunpack.c.l.b16 %v43
    %v88 = vunpack.c.l.b16 %v44
    %v89 = vunpack.c.l.b16 %v45
    %v90 = vunpack.c.l.b16 %v46
    %v91 = vunpack.c.l.b16 %v47
    %v92 = vunpack.c.l.b16 %v48
    %v93 = vpack.c.b16 %v86, %v85
    %v94 = vpack.c.b16 %v88, %v87
    %v95 = vpack.c.b16 %v90, %v89
    %v96 = vpack.c.b16 %v92, %v91
    %v103 = vunpack.c.l.b16 %v49
    %v104 = vunpack.c.h.b16 %v49
    %v105 = vunpack.c.l.b16 %v50
    %v106 = vunpack.c.h.b16 %v50
    %v107 = vunpack.c.l.b16 %v51
    %v108 = vunpack.c.h.b16 %v51
    %v109 = vunpack.c.l.b16 %v52
    %v110 = vunpack.c.h.b16 %v52
    %v111 = vunpack.c.l.b16 %v53
    %v112 = vunpack.c.h.b16 %v53
    %v113 = vunpack.c.l.b16 %v54
    %v114 = vunpack.c.h.b16 %v54
    %v115 = vpack.c.b16 %v107, %v103
    %v116 = vpack.c.b16 %v108, %v104
    %v117 = vpack.c.b16 %v109, %v105
    %v118 = vpack.c.b16 %v110, %v106
    %v119 = vpack.c.b16 %v111, %v111
    %v120 = vpack.c.b16 %v112, %v112
    %v121 = vpack.c.b16 %v113, %v113
    %v122 = vpack.c.b16 %v114, %v114
    %vm127 = vcmask 195584
    %v129 = vsel %vm127, %v93, 0
    %v132 = vsel %vm127, %v94, 0
    %v135 = vsel %vm127, %v95, 0
    %v138 = vsel %vm127, %v96, 0
    %vm140 = vcmask 1043456
    %v142 = vsel %vm140, %v119, 0
    %v145 = vsel %vm140, %v120, 0
    %v148 = vsel %vm140, %v121, 0
    %v151 = vsel %vm140, %v122, 0
    %153 = vmatprep.subr.bf16.mxu0 %v116
    %154 = vmatpush1.bf16.msra.mxu0 %v115
    %155 = vmatprep.subr.bf16.mxu0 %v145
    %156 = vmatpush1.bf16.msra.mxu0 %v142
    %157 = vmatprep.subr.bf16.mxu0 0
    %158 = vmatpush1.bf16.msra.mxu0 0
    %159 = vmatprep.subr.bf16.mxu0 0
    %160 = vmatpush1.bf16.msra.mxu0 0
    %161 = vmatprep.subr.bf16.mxu0 0
    %162 = vmatpush1.bf16.msra.mxu0 0
    %163 = vmatprep.subr.bf16.mxu0 0
    %164 = vmatpush1.bf16.msra.mxu0 0
    %165 = vmatprep.subr.bf16.mxu0 0
    %166 = vmatpush1.bf16.msra.mxu0 0
    %167 = vmatprep.subr.bf16.mxu0 0
    %168 = vmatpush1.bf16.msra.mxu0 0
    %169 = vmatprep.subr.bf16.mxu0 0
    %170 = vmatpush1.bf16.msra.mxu0 0
    %171 = vmatprep.subr.bf16.mxu0 0
    %172 = vmatpush1.bf16.msra.mxu0 0
    %173 = vmatprep.subr.bf16.mxu0 0
    %174 = vmatpush1.bf16.msra.mxu0 0
    %175 = vmatprep.subr.bf16.mxu0 0
    %176 = vmatpush1.bf16.msra.mxu0 0
    %177 = vmatprep.subr.bf16.mxu0 0
    %178 = vmatpush1.bf16.msra.mxu0 0
    %179 = vmatprep.subr.bf16.mxu0 0
    %180 = vmatpush1.bf16.msra.mxu0 0
    %181 = vmatprep.subr.bf16.mxu0 0
    %182 = vmatpush1.bf16.msra.mxu0 0
    %183 = vmatprep.subr.bf16.mxu0 0
    %184 = vmatpush1.bf16.msra.mxu0 0
    %185 = vmatprep.mubr.bf16.mxu0 0
    %186 = vmatmul.mubr.bf16.gmra.mrb[0].mxu0 %v129
    %v187 = vpop.f32.mrb[0].mxu0
    %v188 = vadd.f32 %v60, %v187
    %v189 = vpop.f32.mrb[0].mxu0
    %v190 = vadd.f32 %v64, %v189
    %v191 = vpop.f32.mrb[0].mxu0
    %v192 = vadd.f32 %v60, %v191
    %v193 = vpop.f32.mrb[0].mxu0
    %v194 = vadd.f32 %v64, %v193
    %195 = vmatprep.mubr.bf16.mxu0 0
    %196 = vmatmul.mubr.bf16.gmra.mrb[0].mxu0 %v132
    %v197 = vpop.f32.mrb[0].mxu0
    %v198 = vadd.f32 %v60, %v197
    %v199 = vpop.f32.mrb[0].mxu0
    %v200 = vadd.f32 %v64, %v199
    %v201 = vpop.f32.mrb[0].mxu0
    %v202 = vadd.f32 %v60, %v201
    %v203 = vpop.f32.mrb[0].mxu0
    %v204 = vadd.f32 %v64, %v203
    %205 = vmatprep.mubr.bf16.mxu0 0
    %206 = vmatmul.mubr.bf16.gmra.mrb[0].mxu0 %v135
    %v207 = vpop.f32.mrb[0].mxu0
    %v208 = vadd.f32 %v60, %v207
    %v209 = vpop.f32.mrb[0].mxu0
    %v210 = vadd.f32 %v64, %v209
    %v211 = vpop.f32.mrb[0].mxu0
    %v212 = vadd.f32 %v60, %v211
    %v213 = vpop.f32.mrb[0].mxu0
    %v214 = vadd.f32 %v64, %v213
    %215 = vmatprep.mubr.bf16.mxu0 0
    %216 = vmatmul.mubr.bf16.gmra.mrb[0].mxu0 %v138
    %v217 = vpop.f32.mrb[0].mxu0
    %v218 = vadd.f32 %v60, %v217
    %v219 = vpop.f32.mrb[0].mxu0
    %v220 = vadd.f32 %v64, %v219
    %v221 = vpop.f32.mrb[0].mxu0
    %v222 = vadd.f32 %v60, %v221
    %v223 = vpop.f32.mrb[0].mxu0
    %v224 = vadd.f32 %v64, %v223
    %225 = vdwg.mxu0
    %226 = vmatprep.subr.bf16.mxu0 %v118
    %227 = vmatpush1.bf16.msra.mxu0 %v117
    %228 = vmatprep.subr.bf16.mxu0 %v151
    %229 = vmatpush1.bf16.msra.mxu0 %v148
    %230 = vmatprep.subr.bf16.mxu0 0
    %231 = vmatpush1.bf16.msra.mxu0 0
    %232 = vmatprep.subr.bf16.mxu0 0
    %233 = vmatpush1.bf16.msra.mxu0 0
    %234 = vmatprep.subr.bf16.mxu0 0
    %235 = vmatpush1.bf16.msra.mxu0 0
    %236 = vmatprep.subr.bf16.mxu0 0
    %237 = vmatpush1.bf16.msra.mxu0 0
    %238 = vmatprep.subr.bf16.mxu0 0
    %239 = vmatpush1.bf16.msra.mxu0 0
    %240 = vmatprep.subr.bf16.mxu0 0
    %241 = vmatpush1.bf16.msra.mxu0 0
    %242 = vmatprep.subr.bf16.mxu0 0
    %243 = vmatpush1.bf16.msra.mxu0 0
    %244 = vmatprep.subr.bf16.mxu0 0
    %245 = vmatpush1.bf16.msra.mxu0 0
    %246 = vmatprep.subr.bf16.mxu0 0
    %247 = vmatpush1.bf16.msra.mxu0 0
    %248 = vmatprep.subr.bf16.mxu0 0
    %249 = vmatpush1.bf16.msra.mxu0 0
    %250 = vmatprep.subr.bf16.mxu0 0
    %251 = vmatpush1.bf16.msra.mxu0 0
    %252 = vmatprep.subr.bf16.mxu0 0
    %253 = vmatpush1.bf16.msra.mxu0 0
    %254 = vmatprep.subr.bf16.mxu0 0
    %255 = vmatpush1.bf16.msra.mxu0 0
    %256 = vmatprep.subr.bf16.mxu0 0
    %257 = vmatpush1.bf16.msra.mxu0 0
    %258 = vmatprep.mubr.bf16.mxu0 0
    %259 = vmatmul.mubr.bf16.gmra.mrb[0].mxu0 %v129
    %v260 = vpop.f32.mrb[0].mxu0
    %v261 = vadd.f32 %v68, %v260
    %v262 = vpop.f32.mrb[0].mxu0
    %v263 = vadd.f32 %v72, %v262
    %v264 = vpop.f32.mrb[0].mxu0
    %v265 = vadd.f32 %v68, %v264
    %v266 = vpop.f32.mrb[0].mxu0
    %v267 = vadd.f32 %v72, %v266
    %268 = vmatprep.mubr.bf16.mxu0 0
    %269 = vmatmul.mubr.bf16.gmra.mrb[0].mxu0 %v132
    %v270 = vpop.f32.mrb[0].mxu0
    %v271 = vadd.f32 %v68, %v270
    %v272 = vpop.f32.mrb[0].mxu0
    %v273 = vadd.f32 %v72, %v272
    %v274 = vpop.f32.mrb[0].mxu0
    %v275 = vadd.f32 %v68, %v274
    %v276 = vpop.f32.mrb[0].mxu0
    %v277 = vadd.f32 %v72, %v276
    %278 = vmatprep.mubr.bf16.mxu0 0
    %279 = vmatmul.mubr.bf16.gmra.mrb[0].mxu0 %v135
    %v280 = vpop.f32.mrb[0].mxu0
    %v281 = vadd.f32 %v68, %v280
    %v282 = vpop.f32.mrb[0].mxu0
    %v283 = vadd.f32 %v72, %v282
    %v284 = vpop.f32.mrb[0].mxu0
    %v285 = vadd.f32 %v68, %v284
    %v286 = vpop.f32.mrb[0].mxu0
    %v287 = vadd.f32 %v72, %v286
    %288 = vmatprep.mubr.bf16.mxu0 0
    %289 = vmatmul.mubr.bf16.gmra.mrb[0].mxu0 %v138
    %v290 = vpop.f32.mrb[0].mxu0
    %v291 = vadd.f32 %v68, %v290
    %v292 = vpop.f32.mrb[0].mxu0
    %v293 = vadd.f32 %v72, %v292
    %v294 = vpop.f32.mrb[0].mxu0
    %v295 = vadd.f32 %v68, %v294
    %v296 = vpop.f32.mrb[0].mxu0
    %v297 = vadd.f32 %v72, %v296
    %298 = vdwg.mxu0
    %v299 = vmax.f32 %v188, 0.0
    %v300 = vmax.f32 %v190, 0.0
    %v301 = vmax.f32 %v261, 0.0
    %v302 = vmax.f32 %v263, 0.0
    %v303 = vmax.f32 %v192, 0.0
    %v304 = vmax.f32 %v194, 0.0
    %v305 = vmax.f32 %v265, 0.0
    %v306 = vmax.f32 %v267, 0.0
    %v307 = vmax.f32 %v198, 0.0
    %v308 = vmax.f32 %v200, 0.0
    %v309 = vmax.f32 %v271, 0.0
    %v310 = vmax.f32 %v273, 0.0
    %v311 = vmax.f32 %v202, 0.0
    %v312 = vmax.f32 %v204, 0.0
    %v313 = vmax.f32 %v275, 0.0
    %v314 = vmax.f32 %v277, 0.0
    %v315 = vmax.f32 %v208, 0.0
    %v316 = vmax.f32 %v210, 0.0
    %v317 = vmax.f32 %v281, 0.0
    %v318 = vmax.f32 %v283, 0.0
    %v319 = vmax.f32 %v212, 0.0
    %v320 = vmax.f32 %v214, 0.0
    %v321 = vmax.f32 %v285, 0.0
    %v322 = vmax.f32 %v287, 0.0
    %v323 = vmax.f32 %v218, 0.0
    %v324 = vmax.f32 %v220, 0.0
    %v325 = vmax.f32 %v291, 0.0
    %v326 = vmax.f32 %v293, 0.0
    %v327 = vmax.f32 %v222, 0.0
    %v328 = vmax.f32 %v224, 0.0
    %v329 = vmax.f32 %v295, 0.0
    %v330 = vmax.f32 %v297, 0.0
    %v331 = vpack.c.bf16 %v303, %v299
    %v332 = vpack.c.bf16 %v304, %v300
    %v333 = vpack.c.bf16 %v305, %v301
    %v334 = vpack.c.bf16 %v306, %v302
    %v335 = vpack.c.bf16 %v311, %v307
    %v336 = vpack.c.bf16 %v312, %v308
    %v337 = vpack.c.bf16 %v313, %v309
    %v338 = vpack.c.bf16 %v314, %v310
    %v339 = vpack.c.bf16 %v319, %v315
    %v340 = vpack.c.bf16 %v320, %v316
    %v341 = vpack.c.bf16 %v321, %v317
    %v342 = vpack.c.bf16 %v322, %v318
    %v343 = vpack.c.bf16 %v327, %v323
    %v344 = vpack.c.bf16 %v328, %v324
    %v345 = vpack.c.bf16 %v329, %v325
    %v346 = vpack.c.bf16 %v330, %v326
    %v347 = vld [vmem:[#allocation2] sm:$0xff]
    %v348 = vld [vmem:[#allocation2 + $0x8] sm:$0xf]
    %v349 = vld [vmem:[#allocation2 + $0xc] sm:$0xff]
    %v350 = vld [vmem:[#allocation2 + $0x14] sm:$0xf]
    %v351 = vld [vmem:[#allocation2 + $0x18] sm:$0xff]
    %v352 = vld [vmem:[#allocation2 + $0x20] sm:$0xf]
    %v353 = vld [vmem:[#allocation2 + $0x24] sm:$0xff]
    %v354 = vld [vmem:[#allocation2 + $0x2c] sm:$0xf]
    %v355 = vld [vmem:[#allocation2 + $0x30] sm:$0xff]
    %v356 = vld [vmem:[#allocation2 + $0x38] sm:$0xf]
    %v357 = vld [vmem:[#allocation2 + $0x3c] sm:$0xff]
    %v358 = vld [vmem:[#allocation2 + $0x44] sm:$0xf]
    %v359 = vld [vmem:[#allocation2 + $0x48] sm:$0xff]
    %v360 = vld [vmem:[#allocation2 + $0x50] sm:$0xf]
    %v361 = vld [vmem:[#allocation2 + $0x54] sm:$0xff]
    %v362 = vld [vmem:[#allocation2 + $0x5c] sm:$0xf]
    %v363 = vld [vmem:[#allocation2 + $0x60] sm:$0xff]
    %v364 = vld [vmem:[#allocation2 + $0x68] sm:$0xf]
    %v365 = vld [vmem:[#allocation2 + $0x6c] sm:$0xff]
    %v366 = vld [vmem:[#allocation2 + $0x74] sm:$0xf]
    %v367 = vld [vmem:[#allocation2 + $0x78] sm:$0xff]
    %v368 = vld [vmem:[#allocation2 + $0x80] sm:$0xf]
    %v369 = vld [vmem:[#allocation2 + $0x84] sm:$0xff]
    %v370 = vld [vmem:[#allocation2 + $0x8c] sm:$0xf]
    %v371 = vld [vmem:[#allocation2 + $0x90] sm:$0xff]
    %v372 = vld [vmem:[#allocation2 + $0x98] sm:$0xf]
    %v373 = vld [vmem:[#allocation2 + $0x9c] sm:$0xff]
    %v374 = vld [vmem:[#allocation2 + $0xa4] sm:$0xf]
    %v375 = vld [vmem:[#allocation2 + $0xa8] sm:$0xff]
    %v376 = vld [vmem:[#allocation2 + $0xb0] sm:$0xf]
    %v377 = vld [vmem:[#allocation2 + $0xb4] sm:$0xff]
    %v378 = vld [vmem:[#allocation2 + $0xbc] sm:$0xf]
    %v379 = vld [vmem:[#allocation2 + $0xc0] sm:$0xff]
    %v380 = vld [vmem:[#allocation2 + $0xc8] sm:$0xf]
    %v381 = vld [vmem:[#allocation2 + $0xcc] sm:$0xff]
    %v382 = vld [vmem:[#allocation2 + $0xd4] sm:$0xf]
    %v383 = vld [vmem:[#allocation2 + $0xd8] sm:$0xff]
    %v384 = vld [vmem:[#allocation2 + $0xe0] sm:$0xf]
    %v385 = vld [vmem:[#allocation2 + $0xe4] sm:$0xff]
    %v386 = vld [vmem:[#allocation2 + $0xec] sm:$0xf]
    %v387 = vld [vmem:[#allocation2 + $0xf0] sm:$0xff]
    %v388 = vld [vmem:[#allocation2 + $0xf8] sm:$0xf]
    %v389 = vld [vmem:[#allocation2 + $0xfc] sm:$0xff]
    %v390 = vld [vmem:[#allocation2 + $0x104] sm:$0xf]
    %v391 = vld [vmem:[#allocation2 + $0x108] sm:$0xff]
    %v392 = vld [vmem:[#allocation2 + $0x110] sm:$0xf]
    %v393 = vld [vmem:[#allocation2 + $0x114] sm:$0xff]
    %v394 = vld [vmem:[#allocation2 + $0x11c] sm:$0xf]
    %v395 = vld [vmem:[#allocation2 + $0x120] sm:$0xff]
    %v396 = vld [vmem:[#allocation2 + $0x128] sm:$0xf]
    %v397 = vld [vmem:[#allocation2 + $0x12c] sm:$0xff]
    %v398 = vld [vmem:[#allocation2 + $0x134] sm:$0xf]
    %v399 = vld [vmem:[#allocation2 + $0x138] sm:$0xff]
    %v400 = vld [vmem:[#allocation2 + $0x140] sm:$0xf]
    %v401 = vld [vmem:[#allocation2 + $0x144] sm:$0xff]
    %v402 = vld [vmem:[#allocation2 + $0x14c] sm:$0xf]
    %v403 = vld [vmem:[#allocation2 + $0x150] sm:$0xff]
    %v404 = vld [vmem:[#allocation2 + $0x158] sm:$0xf]
    %v405 = vld [vmem:[#allocation2 + $0x15c] sm:$0xff]
    %v406 = vld [vmem:[#allocation2 + $0x164] sm:$0xf]
    %v407 = vld [vmem:[#allocation2 + $0x168] sm:$0xff]
    %v408 = vld [vmem:[#allocation2 + $0x170] sm:$0xf]
    %v409 = vld [vmem:[#allocation2 + $0x174] sm:$0xff]
    %v410 = vld [vmem:[#allocation2 + $0x17c] sm:$0xf]
    %v411 = vld [vmem:[#allocation2 + $0x180] sm:$0xff]
    %v412 = vld [vmem:[#allocation2 + $0x188] sm:$0xf]
    %v413 = vld [vmem:[#allocation2 + $0x18c] sm:$0xff]
    %v414 = vld [vmem:[#allocation2 + $0x194] sm:$0xf]
    %v415 = vld [vmem:[#allocation2 + $0x198] sm:$0xff]
    %v416 = vld [vmem:[#allocation2 + $0x1a0] sm:$0xf]
    %v417 = vld [vmem:[#allocation2 + $0x1a4] sm:$0xff]
    %v418 = vld [vmem:[#allocation2 + $0x1ac] sm:$0xf]
    %v419 = vld [vmem:[#allocation2 + $0x1b0] sm:$0xff]
    %v420 = vld [vmem:[#allocation2 + $0x1b8] sm:$0xf]
    %v421 = vld [vmem:[#allocation2 + $0x1bc] sm:$0xff]
    %v422 = vld [vmem:[#allocation2 + $0x1c4] sm:$0xf]
    %v423 = vld [vmem:[#allocation2 + $0x1c8] sm:$0xff]
    %v424 = vld [vmem:[#allocation2 + $0x1d0] sm:$0xf]
    %v425 = vld [vmem:[#allocation2 + $0x1d4] sm:$0xff]
    %v426 = vld [vmem:[#allocation2 + $0x1dc] sm:$0xf]
    %v427 = vld [vmem:[#allocation2 + $0x1e0] sm:$0xff]
    %v428 = vld [vmem:[#allocation2 + $0x1e8] sm:$0xf]
    %v429 = vld [vmem:[#allocation2 + $0x1ec] sm:$0xff]
    %v430 = vld [vmem:[#allocation2 + $0x1f4] sm:$0xf]
    %v431 = vld [vmem:[#allocation2 + $0x1f8] sm:$0xff]
    %v432 = vld [vmem:[#allocation2 + $0x200] sm:$0xf]
    %v433 = vld [vmem:[#allocation2 + $0x204] sm:$0xff]
    %v434 = vld [vmem:[#allocation2 + $0x20c] sm:$0xf]
    %v435 = vld [vmem:[#allocation2 + $0x210] sm:$0xff]
    %v436 = vld [vmem:[#allocation2 + $0x218] sm:$0xf]
    %v437 = vld [vmem:[#allocation2 + $0x21c] sm:$0xff]
    %v438 = vld [vmem:[#allocation2 + $0x224] sm:$0xf]
    %v439 = vld [vmem:[#allocation2 + $0x228] sm:$0xff]
    %v440 = vld [vmem:[#allocation2 + $0x230] sm:$0xf]
    %v441 = vld [vmem:[#allocation2 + $0x234] sm:$0xff]
    %v442 = vld [vmem:[#allocation2 + $0x23c] sm:$0xf]
    %v443 = vld [vmem:[#allocation2 + $0x240] sm:$0xff]
    %v444 = vld [vmem:[#allocation2 + $0x248] sm:$0xf]
    %v445 = vld [vmem:[#allocation2 + $0x24c] sm:$0xff]
    %v446 = vld [vmem:[#allocation2 + $0x254] sm:$0xf]
    %v447 = vld [vmem:[%s4] sm:$0x7]
    %v449 = vlaneseq
    %v450 = vshrl.u32 %v449, 7
    %v451 = vsub.s32 0, %v450
    %v452 = vrot.slane %v447, %v451
    %v453 = vlaneseq
    %v454 = vshrl.u32 %v453, 7
    %v455 = vsub.s32 1, %v454
    %v456 = vrot.slane %v447, %v455
    %v457 = vlaneseq
    %v458 = vshrl.u32 %v457, 7
    %v459 = vsub.s32 2, %v458
    %v460 = vrot.slane %v447, %v459
    %v564 = vunpack.c.l.b16 %v347
    %v565 = vunpack.c.h.b16 %v347
    %v566 = vunpack.c.l.b16 %v348
    %v567 = vunpack.c.l.b16 %v349
    %v568 = vunpack.c.h.b16 %v349
    %v569 = vunpack.c.l.b16 %v350
    %v570 = vunpack.c.l.b16 %v351
    %v571 = vunpack.c.h.b16 %v351
    %v572 = vunpack.c.l.b16 %v352
    %v573 = vunpack.c.l.b16 %v353
    %v574 = vunpack.c.h.b16 %v353
    %v575 = vunpack.c.l.b16 %v354
    %v576 = vunpack.c.l.b16 %v355
    %v577 = vunpack.c.h.b16 %v355
    %v578 = vunpack.c.l.b16 %v356
    %v579 = vunpack.c.l.b16 %v357
    %v580 = vunpack.c.h.b16 %v357
    %v581 = vunpack.c.l.b16 %v358
    %v582 = vunpack.c.l.b16 %v359
    %v583 = vunpack.c.h.b16 %v359
    %v584 = vunpack.c.l.b16 %v360
    %v585 = vunpack.c.l.b16 %v361
    %v586 = vunpack.c.h.b16 %v361
    %v587 = vunpack.c.l.b16 %v362
    %v588 = vunpack.c.l.b16 %v363
    %v589 = vunpack.c.h.b16 %v363
    %v590 = vunpack.c.l.b16 %v364
    %v591 = vunpack.c.l.b16 %v365
    %v592 = vunpack.c.h.b16 %v365
    %v593 = vunpack.c.l.b16 %v366
    %v594 = vunpack.c.l.b16 %v367
    %v595 = vunpack.c.h.b16 %v367
    %v596 = vunpack.c.l.b16 %v368
    %v597 = vunpack.c.l.b16 %v369
    %v598 = vunpack.c.h.b16 %v369
    %v599 = vunpack.c.l.b16 %v370
    %v600 = vunpack.c.l.b16 %v371
    %v601 = vunpack.c.h.b16 %v371
    %v602 = vunpack.c.l.b16 %v372
    %v603 = vunpack.c.l.b16 %v373
    %v604 = vunpack.c.h.b16 %v373
    %v605 = vunpack.c.l.b16 %v374
    %v606 = vunpack.c.l.b16 %v375
    %v607 = vunpack.c.h.b16 %v375
    %v608 = vunpack.c.l.b16 %v376
    %v609 = vunpack.c.l.b16 %v377
    %v610 = vunpack.c.h.b16 %v377
    %v611 = vunpack.c.l.b16 %v378
    %v612 = vunpack.c.l.b16 %v379
    %v613 = vunpack.c.h.b16 %v379
    %v614 = vunpack.c.l.b16 %v380
    %v615 = vunpack.c.l.b16 %v381
    %v616 = vunpack.c.h.b16 %v381
    %v617 = vunpack.c.l.b16 %v382
    %v618 = vunpack.c.l.b16 %v383
    %v619 = vunpack.c.h.b16 %v383
    %v620 = vunpack.c.l.b16 %v384
    %v621 = vunpack.c.l.b16 %v385
    %v622 = vunpack.c.h.b16 %v385
    %v623 = vunpack.c.l.b16 %v386
    %v624 = vunpack.c.l.b16 %v387
    %v625 = vunpack.c.h.b16 %v387
    %v626 = vunpack.c.l.b16 %v388
    %v627 = vunpack.c.l.b16 %v389
    %v628 = vunpack.c.h.b16 %v389
    %v629 = vunpack.c.l.b16 %v390
    %v630 = vunpack.c.l.b16 %v391
    %v631 = vunpack.c.h.b16 %v391
    %v632 = vunpack.c.l.b16 %v392
    %v633 = vunpack.c.l.b16 %v393
    %v634 = vunpack.c.h.b16 %v393
    %v635 = vunpack.c.l.b16 %v394
    %v636 = vunpack.c.l.b16 %v395
    %v637 = vunpack.c.h.b16 %v395
    %v638 = vunpack.c.l.b16 %v396
    %v639 = vunpack.c.l.b16 %v397
    %v640 = vunpack.c.h.b16 %v397
    %v641 = vunpack.c.l.b16 %v398
    %v642 = vunpack.c.l.b16 %v399
    %v643 = vunpack.c.h.b16 %v399
    %v644 = vunpack.c.l.b16 %v400
    %v645 = vunpack.c.l.b16 %v401
    %v646 = vunpack.c.h.b16 %v401
    %v647 = vunpack.c.l.b16 %v402
    %v648 = vunpack.c.l.b16 %v403
    %v649 = vunpack.c.h.b16 %v403
    %v650 = vunpack.c.l.b16 %v404
    %v651 = vunpack.c.l.b16 %v405
    %v652 = vunpack.c.h.b16 %v405
    %v653 = vunpack.c.l.b16 %v406
    %v654 = vunpack.c.l.b16 %v407
    %v655 = vunpack.c.h.b16 %v407
    %v656 = vunpack.c.l.b16 %v408
    %v657 = vunpack.c.l.b16 %v409
    %v658 = vunpack.c.h.b16 %v409
    %v659 = vunpack.c.l.b16 %v410
    %v660 = vunpack.c.l.b16 %v411
    %v661 = vunpack.c.h.b16 %v411
    %v662 = vunpack.c.l.b16 %v412
    %v663 = vunpack.c.l.b16 %v413
    %v664 = vunpack.c.h.b16 %v413
    %v665 = vunpack.c.l.b16 %v414
    %v666 = vunpack.c.l.b16 %v415
    %v667 = vunpack.c.h.b16 %v415
    %v668 = vunpack.c.l.b16 %v416
    %v669 = vunpack.c.l.b16 %v417
    %v670 = vunpack.c.h.b16 %v417
    %v671 = vunpack.c.l.b16 %v418
    %v672 = vunpack.c.l.b16 %v419
    %v673 = vunpack.c.h.b16 %v419
    %v674 = vunpack.c.l.b16 %v420
    %v675 = vunpack.c.l.b16 %v421
    %v676 = vunpack.c.h.b16 %v421
    %v677 = vunpack.c.l.b16 %v422
    %v678 = vunpack.c.l.b16 %v423
    %v679 = vunpack.c.h.b16 %v423
    %v680 = vunpack.c.l.b16 %v424
    %v681 = vunpack.c.l.b16 %v425
    %v682 = vunpack.c.h.b16 %v425
    %v683 = vunpack.c.l.b16 %v426
    %v684 = vunpack.c.l.b16 %v427
    %v685 = vunpack.c.h.b16 %v427
    %v686 = vunpack.c.l.b16 %v428
    %v687 = vunpack.c.l.b16 %v429
    %v688 = vunpack.c.h.b16 %v429
    %v689 = vunpack.c.l.b16 %v430
    %v690 = vunpack.c.l.b16 %v431
    %v691 = vunpack.c.h.b16 %v431
    %v692 = vunpack.c.l.b16 %v432
    %v693 = vunpack.c.l.b16 %v433
    %v694 = vunpack.c.h.b16 %v433
    %v695 = vunpack.c.l.b16 %v434
    %v696 = vunpack.c.l.b16 %v435
    %v697 = vunpack.c.h.b16 %v435
    %v698 = vunpack.c.l.b16 %v436
    %v699 = vunpack.c.l.b16 %v437
    %v700 = vunpack.c.h.b16 %v437
    %v701 = vunpack.c.l.b16 %v438
    %v702 = vunpack.c.l.b16 %v439
    %v703 = vunpack.c.h.b16 %v439
    %v704 = vunpack.c.l.b16 %v440
    %v705 = vunpack.c.l.b16 %v441
    %v706 = vunpack.c.h.b16 %v441
    %v707 = vunpack.c.l.b16 %v442
    %v708 = vunpack.c.l.b16 %v443
    %v709 = vunpack.c.h.b16 %v443
    %v710 = vunpack.c.l.b16 %v444
    %v711 = vunpack.c.l.b16 %v445
    %v712 = vunpack.c.h.b16 %v445
    %v713 = vunpack.c.l.b16 %v446
    %v714 = vpack.c.b16 %v567, %v564
    %v715 = vpack.c.b16 %v568, %v565
    %v716 = vpack.c.b16 %v569, %v566
    %v717 = vpack.c.b16 %v573, %v570
    %v718 = vpack.c.b16 %v574, %v571
    %v719 = vpack.c.b16 %v575, %v572
    %v720 = vpack.c.b16 %v579, %v576
    %v721 = vpack.c.b16 %v580, %v577
    %v722 = vpack.c.b16 %v581, %v578
    %v723 = vpack.c.b16 %v585, %v582
    %v724 = vpack.c.b16 %v586, %v583
    %v725 = vpack.c.b16 %v587, %v584
    %v726 = vpack.c.b16 %v591, %v588
    %v727 = vpack.c.b16 %v592, %v589
    %v728 = vpack.c.b16 %v593, %v590
    %v729 = vpack.c.b16 %v597, %v594
    %v730 = vpack.c.b16 %v598, %v595
    %v731 = vpack.c.b16 %v599, %v596
    %v732 = vpack.c.b16 %v603, %v600
    %v733 = vpack.c.b16 %v604, %v601
    %v734 = vpack.c.b16 %v605, %v602
    %v735 = vpack.c.b16 %v609, %v606
    %v736 = vpack.c.b16 %v610, %v607
    %v737 = vpack.c.b16 %v611, %v608
    %v738 = vpack.c.b16 %v615, %v612
    %v739 = vpack.c.b16 %v616, %v613
    %v740 = vpack.c.b16 %v617, %v614
    %v741 = vpack.c.b16 %v621, %v618
    %v742 = vpack.c.b16 %v622, %v619
    %v743 = vpack.c.b16 %v623, %v620
    %v744 = vpack.c.b16 %v627, %v624
    %v745 = vpack.c.b16 %v628, %v625
    %v746 = vpack.c.b16 %v629, %v626
    %v747 = vpack.c.b16 %v633, %v630
    %v748 = vpack.c.b16 %v634, %v631
    %v749 = vpack.c.b16 %v635, %v632
    %v750 = vpack.c.b16 %v639, %v636
    %v751 = vpack.c.b16 %v640, %v637
    %v752 = vpack.c.b16 %v641, %v638
    %v753 = vpack.c.b16 %v645, %v642
    %v754 = vpack.c.b16 %v646, %v643
    %v755 = vpack.c.b16 %v647, %v644
    %v756 = vpack.c.b16 %v651, %v648
    %v757 = vpack.c.b16 %v652, %v649
    %v758 = vpack.c.b16 %v653, %v650
    %v759 = vpack.c.b16 %v657, %v654
    %v760 = vpack.c.b16 %v658, %v655
    %v761 = vpack.c.b16 %v659, %v656
    %v762 = vpack.c.b16 %v663, %v660
    %v763 = vpack.c.b16 %v664, %v661
    %v764 = vpack.c.b16 %v665, %v662
    %v765 = vpack.c.b16 %v669, %v666
    %v766 = vpack.c.b16 %v670, %v667
    %v767 = vpack.c.b16 %v671, %v668
    %v768 = vpack.c.b16 %v675, %v672
    %v769 = vpack.c.b16 %v676, %v673
    %v770 = vpack.c.b16 %v677, %v674
    %v771 = vpack.c.b16 %v681, %v678
    %v772 = vpack.c.b16 %v682, %v679
    %v773 = vpack.c.b16 %v683, %v680
    %v774 = vpack.c.b16 %v687, %v684
    %v775 = vpack.c.b16 %v688, %v685
    %v776 = vpack.c.b16 %v689, %v686
    %v777 = vpack.c.b16 %v693, %v690
    %v778 = vpack.c.b16 %v694, %v691
    %v779 = vpack.c.b16 %v695, %v692
    %v780 = vpack.c.b16 %v699, %v696
    %v781 = vpack.c.b16 %v700, %v697
    %v782 = vpack.c.b16 %v701, %v698
    %v783 = vpack.c.b16 %v705, %v702
    %v784 = vpack.c.b16 %v706, %v703
    %v785 = vpack.c.b16 %v707, %v704
    %v786 = vpack.c.b16 %v711, %v708
    %v787 = vpack.c.b16 %v712, %v709
    %v788 = vpack.c.b16 %v713, %v710
    %vm864 = vcmask 130048
    %v866 = vsel %vm864, %v334, 0
    %v869 = vsel %vm864, %v338, 0
    %v872 = vsel %vm864, %v342, 0
    %v875 = vsel %vm864, %v346, 0
    %877 = vmatprep.subr.bf16.mxu0 %v715
    %878 = vmatpush1.bf16.msra.mxu0 %v714
    %879 = vmatprep.subr.bf16.mxu0 %v718
    %880 = vmatpush1.bf16.msra.mxu0 %v717
    %881 = vmatprep.subr.bf16.mxu0 %v721
    %882 = vmatpush1.bf16.msra.mxu0 %v720
    %883 = vmatprep.subr.bf16.mxu0 %v724
    %884 = vmatpush1.bf16.msra.mxu0 %v723
    %885 = vmatprep.subr.bf16.mxu0 %v727
    %886 = vmatpush1.bf16.msra.mxu0 %v726
    %887 = vmatprep.subr.bf16.mxu0 %v730
    %888 = vmatpush1.bf16.msra.mxu0 %v729
    %889 = vmatprep.subr.bf16.mxu0 %v733
    %890 = vmatpush1.bf16.msra.mxu0 %v732
    %891 = vmatprep.subr.bf16.mxu0 %v736
    %892 = vmatpush1.bf16.msra.mxu0 %v735
    %893 = vmatprep.subr.bf16.mxu0 %v739
    %894 = vmatpush1.bf16.msra.mxu0 %v738
    %895 = vmatprep.subr.bf16.mxu0 %v742
    %896 = vmatpush1.bf16.msra.mxu0 %v741
    %897 = vmatprep.subr.bf16.mxu0 %v745
    %898 = vmatpush1.bf16.msra.mxu0 %v744
    %899 = vmatprep.subr.bf16.mxu0 %v748
    %900 = vmatpush1.bf16.msra.mxu0 %v747
    %901 = vmatprep.subr.bf16.mxu0 %v751
    %902 = vmatpush1.bf16.msra.mxu0 %v750
    %903 = vmatprep.subr.bf16.mxu0 %v754
    %904 = vmatpush1.bf16.msra.mxu0 %v753
    %905 = vmatprep.subr.bf16.mxu0 %v757
    %906 = vmatpush1.bf16.msra.mxu0 %v756
    %907 = vmatprep.subr.bf16.mxu0 %v760
    %908 = vmatpush1.bf16.msra.mxu0 %v759
    %909 = vmatprep.mubr.bf16.mxu0 %v332
    %910 = vmatmul.mubr.bf16.gmra.mrb[0].mxu0 %v331
    %v911 = vpop.f32.mrb[0].mxu0
    %v912 = vadd.f32 %v452, %v911
    %v913 = vpop.f32.mrb[0].mxu0
    %v914 = vadd.f32 %v456, %v913
    %v915 = vpop.f32.mrb[0].mxu0
    %v916 = vadd.f32 %v452, %v915
    %v917 = vpop.f32.mrb[0].mxu0
    %v918 = vadd.f32 %v456, %v917
    %919 = vmatprep.mubr.bf16.mxu0 %v336
    %920 = vmatmul.mubr.bf16.gmra.mrb[0].mxu0 %v335
    %v921 = vpop.f32.mrb[0].mxu0
    %v922 = vadd.f32 %v452, %v921
    %v923 = vpop.f32.mrb[0].mxu0
    %v924 = vadd.f32 %v456, %v923
    %v925 = vpop.f32.mrb[0].mxu0
    %v926 = vadd.f32 %v452, %v925
    %v927 = vpop.f32.mrb[0].mxu0
    %v928 = vadd.f32 %v456, %v927
    %929 = vmatprep.mubr.bf16.mxu0 %v340
    %930 = vmatmul.mubr.bf16.gmra.mrb[0].mxu0 %v339
    %v931 = vpop.f32.mrb[0].mxu0
    %v932 = vadd.f32 %v452, %v931
    %v933 = vpop.f32.mrb[0].mxu0
    %v934 = vadd.f32 %v456, %v933
    %v935 = vpop.f32.mrb[0].mxu0
    %v936 = vadd.f32 %v452, %v935
    %v937 = vpop.f32.mrb[0].mxu0
    %v938 = vadd.f32 %v456, %v937
    %939 = vmatprep.mubr.bf16.mxu0 %v344
    %940 = vmatmul.mubr.bf16.gmra.mrb[0].mxu0 %v343
    %v941 = vpop.f32.mrb[0].mxu0
    %v942 = vadd.f32 %v452, %v941
    %v943 = vpop.f32.mrb[0].mxu0
    %v944 = vadd.f32 %v456, %v943
    %v945 = vpop.f32.mrb[0].mxu0
    %v946 = vadd.f32 %v452, %v945
    %v947 = vpop.f32.mrb[0].mxu0
    %v948 = vadd.f32 %v456, %v947
    %949 = vdwg.mxu0
    %950 = vmatprep.subr.bf16.mxu0 %v763
    %951 = vmatpush1.bf16.msra.mxu0 %v762
    %952 = vmatprep.subr.bf16.mxu0 %v766
    %953 = vmatpush1.bf16.msra.mxu0 %v765
    %954 = vmatprep.subr.bf16.mxu0 %v769
    %955 = vmatpush1.bf16.msra.mxu0 %v768
    %956 = vmatprep.subr.bf16.mxu0 %v772
    %957 = vmatpush1.bf16.msra.mxu0 %v771
    %958 = vmatprep.subr.bf16.mxu0 %v775
    %959 = vmatpush1.bf16.msra.mxu0 %v774
    %960 = vmatprep.subr.bf16.mxu0 %v778
    %961 = vmatpush1.bf16.msra.mxu0 %v777
    %962 = vmatprep.subr.bf16.mxu0 %v781
    %963 = vmatpush1.bf16.msra.mxu0 %v780
    %964 = vmatprep.subr.bf16.mxu0 %v784
    %965 = vmatpush1.bf16.msra.mxu0 %v783
    %966 = vmatprep.subr.bf16.mxu0 %v787
    %967 = vmatpush1.bf16.msra.mxu0 %v786
    %968 = vmatprep.subr.bf16.mxu0 0
    %969 = vmatpush1.bf16.msra.mxu0 0
    %970 = vmatprep.subr.bf16.mxu0 0
    %971 = vmatpush1.bf16.msra.mxu0 0
    %972 = vmatprep.subr.bf16.mxu0 0
    %973 = vmatpush1.bf16.msra.mxu0 0
    %974 = vmatprep.subr.bf16.mxu0 0
    %975 = vmatpush1.bf16.msra.mxu0 0
    %976 = vmatprep.subr.bf16.mxu0 0
    %977 = vmatpush1.bf16.msra.mxu0 0
    %978 = vmatprep.subr.bf16.mxu0 0
    %979 = vmatpush1.bf16.msra.mxu0 0
    %980 = vmatprep.subr.bf16.mxu0 0
    %981 = vmatpush1.bf16.msra.mxu0 0
    %982 = vmatprep.mubr.bf16.mxu0 %v866
    %983 = vmatmul.mubr.bf16.gmra.mrb[0].mxu0 %v333
    %v984 = vpop.f32.mrb[0].mxu0
    %v985 = vadd.f32 %v912, %v984
    %v986 = vpop.f32.mrb[0].mxu0
    %v987 = vadd.f32 %v914, %v986
    %v988 = vpop.f32.mrb[0].mxu0
    %v989 = vadd.f32 %v916, %v988
    %v990 = vpop.f32.mrb[0].mxu0
    %v991 = vadd.f32 %v918, %v990
    %992 = vmatprep.mubr.bf16.mxu0 %v869
    %993 = vmatmul.mubr.bf16.gmra.mrb[0].mxu0 %v337
    %v994 = vpop.f32.mrb[0].mxu0
    %v995 = vadd.f32 %v922, %v994
    %v996 = vpop.f32.mrb[0].mxu0
    %v997 = vadd.f32 %v924, %v996
    %v998 = vpop.f32.mrb[0].mxu0
    %v999 = vadd.f32 %v926, %v998
    %v1000 = vpop.f32.mrb[0].mxu0
    %v1001 = vadd.f32 %v928, %v1000
    %1002 = vmatprep.mubr.bf16.mxu0 %v872
    %1003 = vmatmul.mubr.bf16.gmra.mrb[0].mxu0 %v341
    %v1004 = vpop.f32.mrb[0].mxu0
    %v1005 = vadd.f32 %v932, %v1004
    %v1006 = vpop.f32.mrb[0].mxu0
    %v1007 = vadd.f32 %v934, %v1006
    %v1008 = vpop.f32.mrb[0].mxu0
    %v1009 = vadd.f32 %v936, %v1008
    %v1010 = vpop.f32.mrb[0].mxu0
    %v1011 = vadd.f32 %v938, %v1010
    %1012 = vmatprep.mubr.bf16.mxu0 %v875
    %1013 = vmatmul.mubr.bf16.gmra.mrb[0].mxu0 %v345
    %v1014 = vpop.f32.mrb[0].mxu0
    %v1015 = vadd.f32 %v942, %v1014
    %v1016 = vpop.f32.mrb[0].mxu0
    %v1017 = vadd.f32 %v944, %v1016
    %v1018 = vpop.f32.mrb[0].mxu0
    %v1019 = vadd.f32 %v946, %v1018
    %v1020 = vpop.f32.mrb[0].mxu0
    %v1021 = vadd.f32 %v948, %v1020
    %1022 = vdwg.mxu0
    %1023 = vmatprep.subr.bf16.mxu0 0
    %1024 = vmatpush1.bf16.msra.mxu0 %v716
    %1025 = vmatprep.subr.bf16.mxu0 0
    %1026 = vmatpush1.bf16.msra.mxu0 %v719
    %1027 = vmatprep.subr.bf16.mxu0 0
    %1028 = vmatpush1.bf16.msra.mxu0 %v722
    %1029 = vmatprep.subr.bf16.mxu0 0
    %1030 = vmatpush1.bf16.msra.mxu0 %v725
    %1031 = vmatprep.subr.bf16.mxu0 0
    %1032 = vmatpush1.bf16.msra.mxu0 %v728
    %1033 = vmatprep.subr.bf16.mxu0 0
    %1034 = vmatpush1.bf16.msra.mxu0 %v731
    %1035 = vmatprep.subr.bf16.mxu0 0
    %1036 = vmatpush1.bf16.msra.mxu0 %v734
    %1037 = vmatprep.subr.bf16.mxu0 0
    %1038 = vmatpush1.bf16.msra.mxu0 %v737
    %1039 = vmatprep.subr.bf16.mxu0 0
    %1040 = vmatpush1.bf16.msra.mxu0 %v740
    %1041 = vmatprep.subr.bf16.mxu0 0
    %1042 = vmatpush1.bf16.msra.mxu0 %v743
    %1043 = vmatprep.subr.bf16.mxu0 0
    %1044 = vmatpush1.bf16.msra.mxu0 %v746
    %1045 = vmatprep.subr.bf16.mxu0 0
    %1046 = vmatpush1.bf16.msra.mxu0 %v749
    %1047 = vmatprep.subr.bf16.mxu0 0
    %1048 = vmatpush1.bf16.msra.mxu0 %v752
    %1049 = vmatprep.subr.bf16.mxu0 0
    %1050 = vmatpush1.bf16.msra.mxu0 %v755
    %1051 = vmatprep.subr.bf16.mxu0 0
    %1052 = vmatpush1.bf16.msra.mxu0 %v758
    %1053 = vmatprep.subr.bf16.mxu0 0
    %1054 = vmatpush1.bf16.msra.mxu0 %v761
    %1055 = vmatprep.mubr.bf16.mxu0 %v332
    %1056 = vmatmul.mubr.bf16.gmra.mrb[0].mxu0 %v331
    %v1057 = vpop.f32.mrb[0].mxu0
    %v1058 = vadd.f32 %v460, %v1057
    %v1059 = vpop.f32.mrb[0].mxu0
    %v1060 = vpop.f32.mrb[0].mxu0
    %v1061 = vadd.f32 %v460, %v1060
    %v1062 = vpop.f32.mrb[0].mxu0
    %1063 = vmatprep.mubr.bf16.mxu0 %v336
    %1064 = vmatmul.mubr.bf16.gmra.mrb[0].mxu0 %v335
    %v1065 = vpop.f32.mrb[0].mxu0
    %v1066 = vadd.f32 %v460, %v1065
    %v1067 = vpop.f32.mrb[0].mxu0
    %v1068 = vpop.f32.mrb[0].mxu0
    %v1069 = vadd.f32 %v460, %v1068
    %v1070 = vpop.f32.mrb[0].mxu0
    %1071 = vmatprep.mubr.bf16.mxu0 %v340
    %1072 = vmatmul.mubr.bf16.gmra.mrb[0].mxu0 %v339
    %v1073 = vpop.f32.mrb[0].mxu0
    %v1074 = vadd.f32 %v460, %v1073
    %v1075 = vpop.f32.mrb[0].mxu0
    %v1076 = vpop.f32.mrb[0].mxu0
    %v1077 = vadd.f32 %v460, %v1076
    %v1078 = vpop.f32.mrb[0].mxu0
    %1079 = vmatprep.mubr.bf16.mxu0 %v344
    %1080 = vmatmul.mubr.bf16.gmra.mrb[0].mxu0 %v343
    %v1081 = vpop.f32.mrb[0].mxu0
    %v1082 = vadd.f32 %v460, %v1081
    %v1083 = vpop.f32.mrb[0].mxu0
    %v1084 = vpop.f32.mrb[0].mxu0
    %v1085 = vadd.f32 %v460, %v1084
    %v1086 = vpop.f32.mrb[0].mxu0
    %1087 = vdwg.mxu0
    %1088 = vmatprep.subr.bf16.mxu0 0
    %1089 = vmatpush1.bf16.msra.mxu0 %v764
    %1090 = vmatprep.subr.bf16.mxu0 0
    %1091 = vmatpush1.bf16.msra.mxu0 %v767
    %1092 = vmatprep.subr.bf16.mxu0 0
    %1093 = vmatpush1.bf16.msra.mxu0 %v770
    %1094 = vmatprep.subr.bf16.mxu0 0
    %1095 = vmatpush1.bf16.msra.mxu0 %v773
    %1096 = vmatprep.subr.bf16.mxu0 0
    %1097 = vmatpush1.bf16.msra.mxu0 %v776
    %1098 = vmatprep.subr.bf16.mxu0 0
    %1099 = vmatpush1.bf16.msra.mxu0 %v779
    %1100 = vmatprep.subr.bf16.mxu0 0
    %1101 = vmatpush1.bf16.msra.mxu0 %v782
    %1102 = vmatprep.subr.bf16.mxu0 0
    %1103 = vmatpush1.bf16.msra.mxu0 %v785
    %1104 = vmatprep.subr.bf16.mxu0 0
    %1105 = vmatpush1.bf16.msra.mxu0 %v788
    %1106 = vmatprep.subr.bf16.mxu0 0
    %1107 = vmatpush1.bf16.msra.mxu0 0
    %1108 = vmatprep.subr.bf16.mxu0 0
    %1109 = vmatpush1.bf16.msra.mxu0 0
    %1110 = vmatprep.subr.bf16.mxu0 0
    %1111 = vmatpush1.bf16.msra.mxu0 0
    %1112 = vmatprep.subr.bf16.mxu0 0
    %1113 = vmatpush1.bf16.msra.mxu0 0
    %1114 = vmatprep.subr.bf16.mxu0 0
    %1115 = vmatpush1.bf16.msra.mxu0 0
    %1116 = vmatprep.subr.bf16.mxu0 0
    %1117 = vmatpush1.bf16.msra.mxu0 0
    %1118 = vmatprep.subr.bf16.mxu0 0
    %1119 = vmatpush1.bf16.msra.mxu0 0
    %1120 = vmatprep.mubr.bf16.mxu0 %v866
    %1121 = vmatmul.mubr.bf16.gmra.mrb[0].mxu0 %v333
    %v1122 = vpop.f32.mrb[0].mxu0
    %v1123 = vadd.f32 %v1058, %v1122
    %v1124 = vpop.f32.mrb[0].mxu0
    %v1125 = vpop.f32.mrb[0].mxu0
    %v1126 = vadd.f32 %v1061, %v1125
    %v1127 = vpop.f32.mrb[0].mxu0
    %1128 = vmatprep.mubr.bf16.mxu0 %v869
    %1129 = vmatmul.mubr.bf16.gmra.mrb[0].mxu0 %v337
    %v1130 = vpop.f32.mrb[0].mxu0
    %v1131 = vadd.f32 %v1066, %v1130
    %v1132 = vpop.f32.mrb[0].mxu0
    %v1133 = vpop.f32.mrb[0].mxu0
    %v1134 = vadd.f32 %v1069, %v1133
    %v1135 = vpop.f32.mrb[0].mxu0
    %1136 = vmatprep.mubr.bf16.mxu0 %v872
    %1137 = vmatmul.mubr.bf16.gmra.mrb[0].mxu0 %v341
    %v1138 = vpop.f32.mrb[0].mxu0
    %v1139 = vadd.f32 %v1074, %v1138
    %v1140 = vpop.f32.mrb[0].mxu0
    %v1141 = vpop.f32.mrb[0].mxu0
    %v1142 = vadd.f32 %v1077, %v1141
    %v1143 = vpop.f32.mrb[0].mxu0
    %1144 = vmatprep.mubr.bf16.mxu0 %v875
    %1145 = vmatmul.mubr.bf16.gmra.mrb[0].mxu0 %v345
    %v1146 = vpop.f32.mrb[0].mxu0
    %v1147 = vadd.f32 %v1082, %v1146
    %v1148 = vpop.f32.mrb[0].mxu0
    %v1149 = vpop.f32.mrb[0].mxu0
    %v1150 = vadd.f32 %v1085, %v1149
    %v1151 = vpop.f32.mrb[0].mxu0
    %1152 = vdwg.mxu0
    %v1153 = vmax.f32 %v985, 0.0
    %v1154 = vmax.f32 %v987, 0.0
    %v1155 = vmax.f32 %v1123, 0.0
    %v1156 = vmax.f32 %v989, 0.0
    %v1157 = vmax.f32 %v991, 0.0
    %v1158 = vmax.f32 %v1126, 0.0
    %v1159 = vmax.f32 %v995, 0.0
    %v1160 = vmax.f32 %v997, 0.0
    %v1161 = vmax.f32 %v1131, 0.0
    %v1162 = vmax.f32 %v999, 0.0
    %v1163 = vmax.f32 %v1001, 0.0
    %v1164 = vmax.f32 %v1134, 0.0
    %v1165 = vmax.f32 %v1005, 0.0
    %v1166 = vmax.f32 %v1007, 0.0
    %v1167 = vmax.f32 %v1139, 0.0
    %v1168 = vmax.f32 %v1009, 0.0
    %v1169 = vmax.f32 %v1011, 0.0
    %v1170 = vmax.f32 %v1142, 0.0
    %v1171 = vmax.f32 %v1015, 0.0
    %v1172 = vmax.f32 %v1017, 0.0
    %v1173 = vmax.f32 %v1147, 0.0
    %v1174 = vmax.f32 %v1019, 0.0
    %v1175 = vmax.f32 %v1021, 0.0
    %v1176 = vmax.f32 %v1150, 0.0
    %v1177 = vpack.c.bf16 %v1156, %v1153
    %v1178 = vpack.c.bf16 %v1157, %v1154
    %v1179 = vpack.c.bf16 %v1158, %v1155
    %v1180 = vpack.c.bf16 %v1162, %v1159
    %v1181 = vpack.c.bf16 %v1163, %v1160
    %v1182 = vpack.c.bf16 %v1164, %v1161
    %v1183 = vpack.c.bf16 %v1168, %v1165
    %v1184 = vpack.c.bf16 %v1169, %v1166
    %v1185 = vpack.c.bf16 %v1170, %v1167
    %v1186 = vpack.c.bf16 %v1174, %v1171
    %v1187 = vpack.c.bf16 %v1175, %v1172
    %v1188 = vpack.c.bf16 %v1176, %v1173
    %v1189 = vld [vmem:[%s5] sm:$0xf]
    %v1190 = vld [vmem:[%s5 + $0x4] sm:$0xf]
    %v1191 = vld [vmem:[%s5 + $0x8] sm:$0xf]
    %v1192 = vld [vmem:[%s5 + $0xc] sm:$0xf]
    %v1193 = vld [vmem:[%s5 + $0x10] sm:$0xf]
    %v1194 = vld [vmem:[%s5 + $0x14] sm:$0xf]
    %v1195 = vld [vmem:[%s5 + $0x18] sm:$0xf]
    %v1196 = vld [vmem:[%s5 + $0x1c] sm:$0xf]
    %v1197 = vld [vmem:[%s5 + $0x20] sm:$0xf]
    %v1198 = vld [vmem:[%s5 + $0x24] sm:$0xf]
    %v1199 = vld [vmem:[%s5 + $0x28] sm:$0xf]
    %v1200 = vld [vmem:[%s5 + $0x2c] sm:$0xf]
    %v1201 = vld [vmem:[%s5 + $0x30] sm:$0xf]
    %v1202 = vld [vmem:[%s5 + $0x34] sm:$0xf]
    %v1203 = vld [vmem:[%s5 + $0x38] sm:$0xf]
    %v1204 = vld [vmem:[%s5 + $0x3c] sm:$0xf]
    %v1205 = vld [vmem:[%s5 + $0x40] sm:$0xf]
    %v1206 = vld [vmem:[%s5 + $0x44] sm:$0xf]
    %v1207 = vld [vmem:[%s5 + $0x48] sm:$0xf]
    %v1208 = vld [vmem:[%s5 + $0x4c] sm:$0xf]
    %v1209 = vld [vmem:[%s5 + $0x50] sm:$0xf]
    %v1210 = vld [vmem:[%s5 + $0x54] sm:$0xf]
    %v1211 = vld [vmem:[%s5 + $0x58] sm:$0xf]
    %v1212 = vld [vmem:[%s5 + $0x5c] sm:$0xf]
    %v1213 = vld [vmem:[%s5 + $0x60] sm:$0xf]
    %v1214 = vld [vmem:[%s5 + $0x64] sm:$0xf]
    %v1215 = vld [vmem:[%s5 + $0x68] sm:$0xf]
    %v1216 = vld [vmem:[%s5 + $0x6c] sm:$0xf]
    %v1217 = vld [vmem:[%s5 + $0x70] sm:$0xf]
    %v1218 = vld [vmem:[%s5 + $0x74] sm:$0xf]
    %v1219 = vld [vmem:[%s5 + $0x78] sm:$0xf]
    %v1220 = vld [vmem:[%s5 + $0x7c] sm:$0xf]
    %v1221 = vld [vmem:[%s5 + $0x80] sm:$0xf]
    %v1222 = vld [vmem:[%s5 + $0x84] sm:$0xf]
    %v1223 = vld [vmem:[%s5 + $0x88] sm:$0xf]
    %v1224 = vld [vmem:[%s5 + $0x8c] sm:$0xf]
    %v1225 = vld [vmem:[%s5 + $0x90] sm:$0xf]
    %v1226 = vld [vmem:[%s5 + $0x94] sm:$0x3]
    %v1227 = vld [vmem:[%s6] sm:$0x1]
    %v1229 = vlaneseq
    %v1230 = vshrl.u32 %v1229, 7
    %v1231 = vsub.s32 0, %v1230
    %v1232 = vrot.slane %v1227, %v1231
    %v1272 = vunpack.c.l.b16 %v1189
    %v1273 = vunpack.c.l.b16 %v1190
    %v1274 = vunpack.c.l.b16 %v1191
    %v1275 = vunpack.c.l.b16 %v1192
    %v1276 = vunpack.c.l.b16 %v1193
    %v1277 = vunpack.c.l.b16 %v1194
    %v1278 = vunpack.c.l.b16 %v1195
    %v1279 = vunpack.c.l.b16 %v1196
    %v1280 = vunpack.c.l.b16 %v1197
    %v1281 = vunpack.c.l.b16 %v1198
    %v1282 = vunpack.c.l.b16 %v1199
    %v1283 = vunpack.c.l.b16 %v1200
    %v1284 = vunpack.c.l.b16 %v1201
    %v1285 = vunpack.c.l.b16 %v1202
    %v1286 = vunpack.c.l.b16 %v1203
    %v1287 = vunpack.c.l.b16 %v1204
    %v1288 = vunpack.c.l.b16 %v1205
    %v1289 = vunpack.c.l.b16 %v1206
    %v1290 = vunpack.c.l.b16 %v1207
    %v1291 = vunpack.c.l.b16 %v1208
    %v1292 = vunpack.c.l.b16 %v1209
    %v1293 = vunpack.c.l.b16 %v1210
    %v1294 = vunpack.c.l.b16 %v1211
    %v1295 = vunpack.c.l.b16 %v1212
    %v1296 = vunpack.c.l.b16 %v1213
    %v1297 = vunpack.c.l.b16 %v1214
    %v1298 = vunpack.c.l.b16 %v1215
    %v1299 = vunpack.c.l.b16 %v1216
    %v1300 = vunpack.c.l.b16 %v1217
    %v1301 = vunpack.c.l.b16 %v1218
    %v1302 = vunpack.c.l.b16 %v1219
    %v1303 = vunpack.c.l.b16 %v1220
    %v1304 = vunpack.c.l.b16 %v1221
    %v1305 = vunpack.c.l.b16 %v1222
    %v1306 = vunpack.c.l.b16 %v1223
    %v1307 = vunpack.c.l.b16 %v1224
    %v1308 = vunpack.c.l.b16 %v1225
    %v1309 = vunpack.c.l.b16 %v1226
    %v1310 = vpack.c.b16 %v1273, %v1272
    %v1311 = vpack.c.b16 %v1275, %v1274
    %v1312 = vpack.c.b16 %v1277, %v1276
    %v1313 = vpack.c.b16 %v1279, %v1278
    %v1314 = vpack.c.b16 %v1281, %v1280
    %v1315 = vpack.c.b16 %v1283, %v1282
    %v1316 = vpack.c.b16 %v1285, %v1284
    %v1317 = vpack.c.b16 %v1287, %v1286
    %v1318 = vpack.c.b16 %v1289, %v1288
    %v1319 = vpack.c.b16 %v1291, %v1290
    %v1320 = vpack.c.b16 %v1293, %v1292
    %v1321 = vpack.c.b16 %v1295, %v1294
    %v1322 = vpack.c.b16 %v1297, %v1296
    %v1323 = vpack.c.b16 %v1299, %v1298
    %v1324 = vpack.c.b16 %v1301, %v1300
    %v1325 = vpack.c.b16 %v1303, %v1302
    %v1326 = vpack.c.b16 %v1305, %v1304
    %v1327 = vpack.c.b16 %v1307, %v1306
    %v1328 = vpack.c.b16 %v1309, %v1308
    %vm1347 = vcmask 359424
    %v1349 = vsel %vm1347, %v1179, 0
    %v1352 = vsel %vm1347, %v1182, 0
    %v1355 = vsel %vm1347, %v1185, 0
    %v1358 = vsel %vm1347, %v1188, 0
    %vm1360 = vcmask 1045504
    %v1362 = vsel %vm1360, %v1328, 0
    %1364 = vmatprep.subr.bf16.mxu0 0
    %1365 = vmatpush1.bf16.msra.mxu0 %v1310
    %1366 = vmatprep.subr.bf16.mxu0 0
    %1367 = vmatpush1.bf16.msra.mxu0 %v1311
    %1368 = vmatprep.subr.bf16.mxu0 0
    %1369 = vmatpush1.bf16.msra.mxu0 %v1312
    %1370 = vmatprep.subr.bf16.mxu0 0
    %1371 = vmatpush1.bf16.msra.mxu0 %v1313
    %1372 = vmatprep.subr.bf16.mxu0 0
    %1373 = vmatpush1.bf16.msra.mxu0 %v1314
    %1374 = vmatprep.subr.bf16.mxu0 0
    %1375 = vmatpush1.bf16.msra.mxu0 %v1315
    %1376 = vmatprep.subr.bf16.mxu0 0
    %1377 = vmatpush1.bf16.msra.mxu0 %v1316
    %1378 = vmatprep.subr.bf16.mxu0 0
    %1379 = vmatpush1.bf16.msra.mxu0 %v1317
    %1380 = vmatprep.subr.bf16.mxu0 0
    %1381 = vmatpush1.bf16.msra.mxu0 %v1318
    %1382 = vmatprep.subr.bf16.mxu0 0
    %1383 = vmatpush1.bf16.msra.mxu0 %v1319
    %1384 = vmatprep.subr.bf16.mxu0 0
    %1385 = vmatpush1.bf16.msra.mxu0 %v1320
    %1386 = vmatprep.subr.bf16.mxu0 0
    %1387 = vmatpush1.bf16.msra.mxu0 %v1321
    %1388 = vmatprep.subr.bf16.mxu0 0
    %1389 = vmatpush1.bf16.msra.mxu0 %v1322
    %1390 = vmatprep.subr.bf16.mxu0 0
    %1391 = vmatpush1.bf16.msra.mxu0 %v1323
    %1392 = vmatprep.subr.bf16.mxu0 0
    %1393 = vmatpush1.bf16.msra.mxu0 %v1324
    %1394 = vmatprep.subr.bf16.mxu0 0
    %1395 = vmatpush1.bf16.msra.mxu0 %v1325
    %1396 = vmatprep.mubr.bf16.mxu0 %v1178
    %1397 = vmatmul.mubr.bf16.gmra.mrb[0].mxu0 %v1177
    %v1398 = vpop.f32.mrb[0].mxu0
    %v1399 = vadd.f32 %v1232, %v1398
    %v1400 = vpop.f32.mrb[0].mxu0
    %v1401 = vpop.f32.mrb[0].mxu0
    %v1402 = vadd.f32 %v1232, %v1401
    %v1403 = vpop.f32.mrb[0].mxu0
    %1404 = vmatprep.mubr.bf16.mxu0 %v1181
    %1405 = vmatmul.mubr.bf16.gmra.mrb[0].mxu0 %v1180
    %v1406 = vpop.f32.mrb[0].mxu0
    %v1407 = vadd.f32 %v1232, %v1406
    %v1408 = vpop.f32.mrb[0].mxu0
    %v1409 = vpop.f32.mrb[0].mxu0
    %v1410 = vadd.f32 %v1232, %v1409
    %v1411 = vpop.f32.mrb[0].mxu0
    %1412 = vmatprep.mubr.bf16.mxu0 %v1184
    %1413 = vmatmul.mubr.bf16.gmra.mrb[0].mxu0 %v1183
    %v1414 = vpop.f32.mrb[0].mxu0
    %v1415 = vadd.f32 %v1232, %v1414
    %v1416 = vpop.f32.mrb[0].mxu0
    %v1417 = vpop.f32.mrb[0].mxu0
    %v1418 = vadd.f32 %v1232, %v1417
    %v1419 = vpop.f32.mrb[0].mxu0
    %1420 = vmatprep.mubr.bf16.mxu0 %v1187
    %1421 = vmatmul.mubr.bf16.gmra.mrb[0].mxu0 %v1186
    %v1422 = vpop.f32.mrb[0].mxu0
    %v1423 = vadd.f32 %v1232, %v1422
    %v1424 = vpop.f32.mrb[0].mxu0
    %v1425 = vpop.f32.mrb[0].mxu0
    %v1426 = vadd.f32 %v1232, %v1425
    %v1427 = vpop.f32.mrb[0].mxu0
    %1428 = vdwg.mxu0
    %1429 = vmatprep.subr.bf16.mxu0 0
    %1430 = vmatpush1.bf16.msra.mxu0 %v1326
    %1431 = vmatprep.subr.bf16.mxu0 0
    %1432 = vmatpush1.bf16.msra.mxu0 %v1327
    %1433 = vmatprep.subr.bf16.mxu0 0
    %1434 = vmatpush1.bf16.msra.mxu0 %v1362
    %1435 = vmatprep.subr.bf16.mxu0 0
    %1436 = vmatpush1.bf16.msra.mxu0 0
    %1437 = vmatprep.subr.bf16.mxu0 0
    %1438 = vmatpush1.bf16.msra.mxu0 0
    %1439 = vmatprep.subr.bf16.mxu0 0
    %1440 = vmatpush1.bf16.msra.mxu0 0
    %1441 = vmatprep.subr.bf16.mxu0 0
    %1442 = vmatpush1.bf16.msra.mxu0 0
    %1443 = vmatprep.subr.bf16.mxu0 0
    %1444 = vmatpush1.bf16.msra.mxu0 0
    %1445 = vmatprep.subr.bf16.mxu0 0
    %1446 = vmatpush1.bf16.msra.mxu0 0
    %1447 = vmatprep.subr.bf16.mxu0 0
    %1448 = vmatpush1.bf16.msra.mxu0 0
    %1449 = vmatprep.subr.bf16.mxu0 0
    %1450 = vmatpush1.bf16.msra.mxu0 0
    %1451 = vmatprep.subr.bf16.mxu0 0
    %1452 = vmatpush1.bf16.msra.mxu0 0
    %1453 = vmatprep.subr.bf16.mxu0 0
    %1454 = vmatpush1.bf16.msra.mxu0 0
    %1455 = vmatprep.subr.bf16.mxu0 0
    %1456 = vmatpush1.bf16.msra.mxu0 0
    %1457 = vmatprep.subr.bf16.mxu0 0
    %1458 = vmatpush1.bf16.msra.mxu0 0
    %1459 = vmatprep.subr.bf16.mxu0 0
    %1460 = vmatpush1.bf16.msra.mxu0 0
    %1461 = vmatprep.mubr.bf16.mxu0 0
    %1462 = vmatmul.mubr.bf16.gmra.mrb[0].mxu0 %v1349
    %v1463 = vpop.f32.mrb[0].mxu0
    %v1464 = vadd.f32 %v1399, %v1463
    %v1465 = vpop.f32.mrb[0].mxu0
    %v1466 = vpop.f32.mrb[0].mxu0
    %v1467 = vadd.f32 %v1402, %v1466
    %v1468 = vpop.f32.mrb[0].mxu0
    %1469 = vmatprep.mubr.bf16.mxu0 0
    %1470 = vmatmul.mubr.bf16.gmra.mrb[0].mxu0 %v1352
    %v1471 = vpop.f32.mrb[0].mxu0
    %v1472 = vadd.f32 %v1407, %v1471
    %v1473 = vpop.f32.mrb[0].mxu0
    %v1474 = vpop.f32.mrb[0].mxu0
    %v1475 = vadd.f32 %v1410, %v1474
    %v1476 = vpop.f32.mrb[0].mxu0
    %1477 = vmatprep.mubr.bf16.mxu0 0
    %1478 = vmatmul.mubr.bf16.gmra.mrb[0].mxu0 %v1355
    %v1479 = vpop.f32.mrb[0].mxu0
    %v1480 = vadd.f32 %v1415, %v1479
    %v1481 = vpop.f32.mrb[0].mxu0
    %v1482 = vpop.f32.mrb[0].mxu0
    %v1483 = vadd.f32 %v1418, %v1482
    %v1484 = vpop.f32.mrb[0].mxu0
    %1485 = vmatprep.mubr.bf16.mxu0 0
    %1486 = vmatmul.mubr.bf16.gmra.mrb[0].mxu0 %v1358
    %v1487 = vpop.f32.mrb[0].mxu0
    %v1488 = vadd.f32 %v1423, %v1487
    %v1489 = vpop.f32.mrb[0].mxu0
    %v1490 = vpop.f32.mrb[0].mxu0
    %v1491 = vadd.f32 %v1426, %v1490
    %v1492 = vpop.f32.mrb[0].mxu0
    %1493 = vdwg.mxu0
    %v1494 = vtanh.pop %v1464
    %v1495 = vtanh.pop %v1467
    %v1496 = vtanh.pop %v1472
    %v1497 = vtanh.pop %v1475
    %v1498 = vtanh.pop %v1480
    %v1499 = vtanh.pop %v1483
    %v1500 = vtanh.pop %v1488
    %v1501 = vtanh.pop %v1491
    %vm1502 = vcmask 31744
    %1503 = vst.msk [vmem:[%s7] sm:$0xff] %vm1502, %v1494
    %1504 = vst.msk [vmem:[%s7 + $0x8] sm:$0xff] %vm1502, %v1495
    %1505 = vst.msk [vmem:[%s7 + $0x10] sm:$0xff] %vm1502, %v1496
    %1506 = vst.msk [vmem:[%s7 + $0x18] sm:$0xff] %vm1502, %v1497
    %1507 = vst.msk [vmem:[%s7 + $0x20] sm:$0xff] %vm1502, %v1498
    %1508 = vst.msk [vmem:[%s7 + $0x28] sm:$0xff] %vm1502, %v1499
    %1509 = vst.msk [vmem:[%s7 + $0x30] sm:$0xff] %vm1502, %v1500
    %1510 = vst.msk [vmem:[%s7 + $0x38] sm:$0xff] %vm1502, %v1501
    // Predicated region
    $region34: #{tpu_custom_call.1} parent=1 // pred_check
      _
    $region35: #{tpu_custom_call.1} parent=1 // pred_check_branch
      %1512 = sbr.rel (0) target = $region37
    $region36: #{tpu_custom_call.1} parent=1 // pred_region
      _
    $region37: #{tpu_custom_call.1} parent=1 // pred_fallthru
      _
    // Predicated region
    $region38: #{tpu_custom_call.1} parent=1 // pred_check
      _
    $region39: #{tpu_custom_call.1} parent=1 // pred_check_branch
      %1514 = sbr.rel (0) target = $region41
    $region40: #{tpu_custom_call.1} parent=1 // pred_region
      _
    $region41: #{tpu_custom_call.1} parent=1 // pred_fallthru
      _
    %1515 = vsyncpa [#allocation3], 1

</llo_original>
